<compile_context>
chip_gen: v5e
topology: v5e:2x2
jax: 0.10.0
libtpu: 0.0.40
codegen_flags: <defaults>
</compile_context>

<pallas_src>
import jax
import jax.numpy as jnp
from jax.experimental import pallas as pl
from jax.experimental.pallas import tpu as pltpu


def _round_up(n, m):
    return ((n + m - 1) // m) * m


def ffn_kernel(x_ref, w1_ref, b1_ref, w2_ref, b2_ref, o_ref, acc_ref):
    # x_ref:  (tm, Cp) bf16     w1_ref: (Cp, th) bf16    b1_ref: (1, th) f32
    # w2_ref: (th, Cp) bf16     b2_ref: (1, Cp) f32
    # o_ref:  (tm, Cp) out dtype                         acc_ref: (tm, Cp) f32
    h_idx = pl.program_id(1)

    @pl.when(h_idx == 0)
    def _():
        acc_ref[...] = jnp.zeros_like(acc_ref)

    # First matmul + bias + ReLU: separable across hidden columns, so it can
    # be fused per hidden slice.
    h = jnp.dot(x_ref[...], w1_ref[...], preferred_element_type=jnp.float32)
    h = jnp.maximum(h + b1_ref[...], 0.0)

    # Second matmul: partial contribution of this hidden slice, f32 accumulate.
    acc_ref[...] += jnp.dot(h.astype(w2_ref.dtype), w2_ref[...],
                            preferred_element_type=jnp.float32)

    @pl.when(h_idx == pl.num_programs(1) - 1)
    def _():
        # Bias + cast once, on the last reduction step. Dropout (eval) = id.
        o_ref[...] = (acc_ref[...] + b2_ref[...]).astype(o_ref.dtype)


def feed_forward(x, w1, b1, w2, b2, *, tm=256, th=512,
                 compute_dtype=jnp.bfloat16):
    """x: (B, T, C); w1: (C, H); b1: (1, H); w2: (H, C); b2: (1, C).

    Weights are stored transposed relative to torch.nn.Linear so the kernel
    computes row-major  y = relu(x @ W1 + b1) @ W2 + b2,  H = 4*C.
    """
    B, T, C = x.shape
    H = w1.shape[1]
    M = B * T

    # Lane-dense / MXU-friendly padded sizes and tiles.
    Cp = _round_up(C, 128)
    tm = min(tm, _round_up(M, 8))        # row tile, multiple of 8 sublanes
    th = min(th, _round_up(H, 128))      # hidden tile, multiple of 128 lanes
    Mp = _round_up(M, tm)
    Hp = _round_up(H, th)
    n_m = Mp // tm
    n_h = Hp // th

    def pad_to(a, shape, dtype):
        a = a.astype(dtype)
        if a.shape == shape:
            return a
        return jnp.zeros(shape, dtype).at[: a.shape[0], : a.shape[1]].set(a)

    x2 = x.reshape(M, C)
    xp = pad_to(x2, (Mp, Cp), compute_dtype)
    w1p = pad_to(w1, (Cp, Hp), compute_dtype)
    b1p = pad_to(b1, (1, Hp), jnp.float32)
    w2p = pad_to(w2, (Hp, Cp), compute_dtype)
    b2p = pad_to(b2, (1, Cp), jnp.float32)

    # Deeper weight-slice buffering only matters when H is actually tiled.
    def w_spec(shape, index_map):
        if n_h > 1:
            return pl.BlockSpec(shape, index_map, pipeline_mode=pl.Buffered(3))
        return pl.BlockSpec(shape, index_map)

    itemsize = jnp.dtype(compute_dtype).itemsize
    cost = pl.CostEstimate(
        flops=4 * M * C * H,                      # two matmuls, 2*M*C*H each
        transcendentals=0,
        bytes_accessed=(xp.size + w1p.size + w2p.size) * itemsize
        + (b1p.size + b2p.size) * 4
        + Mp * Cp * jnp.dtype(x.dtype).itemsize,
    )

    out = pl.pallas_call(
        ffn_kernel,
        out_shape=jax.ShapeDtypeStruct((Mp, Cp), x.dtype),
        grid_spec=pltpu.PrefetchScalarGridSpec(
            num_scalar_prefetch=0,
            grid=(n_m, n_h),                       # reduction axis (H) is last
            in_specs=[
                pl.BlockSpec((tm, Cp), lambda i, h: (i, 0)),   # x rows
                w_spec((Cp, th), lambda i, h: (0, h)),         # W1 slice
                pl.BlockSpec((1, th), lambda i, h: (0, h)),    # b1 slice
                w_spec((th, Cp), lambda i, h: (h, 0)),         # W2 slice
                pl.BlockSpec((1, Cp), lambda i, h: (0, 0)),    # b2
            ],
            out_specs=pl.BlockSpec((tm, Cp), lambda i, h: (i, 0)),
            scratch_shapes=[pltpu.VMEM((tm, Cp), jnp.float32)],
        ),
        compiler_params=pltpu.CompilerParams(
            dimension_semantics=("parallel", "arbitrary"),
            vmem_limit_bytes=48 * 1024 * 1024,
        ),
        cost_estimate=cost,
    )(xp, w1p, b1p, w2p, b2p)

    return out[:M, :C].reshape(B, T, C)


def reference(x, w1, b1, w2, b2):
    h = jnp.maximum(x @ w1 + b1[0], 0.0)
    return h @ w2 + b2[0]


if __name__ == "__main__":
    # Small shapes implied by the module: a sequence of token embeddings.
    B, T, n_embeds = 2, 8, 32
    hidden = 4 * n_embeds  # 128

    key = jax.random.PRNGKey(0)
    kx, k1, k2, k3, k4 = jax.random.split(key, 5)

    dtype = jnp.float32
    x = jax.random.normal(kx, (B, T, n_embeds), dtype=dtype)

    # Deterministic parameter init (shapes match nn.Linear, stored transposed).
    scale1 = 1.0 / jnp.sqrt(n_embeds)
    scale2 = 1.0 / jnp.sqrt(hidden)
    w1 = jax.random.uniform(k1, (n_embeds, hidden), dtype, -1.0, 1.0) * scale1
    b1 = jax.random.uniform(k2, (1, hidden), dtype, -1.0, 1.0) * scale1
    w2 = jax.random.uniform(k3, (hidden, n_embeds), dtype, -1.0, 1.0) * scale2
    b2 = jax.random.uniform(k4, (1, n_embeds), dtype, -1.0, 1.0) * scale2

    y = feed_forward(x, w1, b1, w2, b2)
    jax.block_until_ready(y)

    y_ref = reference(x, w1, b1, w2, b2)
    assert y.shape == (B, T, n_embeds)
    # bf16 matmuls with f32 accumulation: allow bf16-level deviation.
    assert jnp.allclose(y, y_ref, atol=2e-2, rtol=2e-2), "mismatch vs reference"

    print("KERNEL_OK")
</pallas_src>

<mosaic_0001>
module attributes {stable_mosaic.version = 11 : i64} {
  func.func @ffn_kernel(%arg0: i32, %arg1: i32, %arg2: memref<16x128xbf16, #tpu.memory_space<vmem>>, %arg3: memref<128x128xbf16, #tpu.memory_space<vmem>>, %arg4: memref<1x128xf32, #tpu.memory_space<vmem>>, %arg5: memref<128x128xbf16, #tpu.memory_space<vmem>>, %arg6: memref<1x128xf32, #tpu.memory_space<vmem>>, %arg7: memref<16x128xf32, #tpu.memory_space<vmem>>, %arg8: memref<16x128xf32, #tpu.memory_space<vmem>>) attributes {dimension_semantics = [#tpu.dimension_semantics<parallel>, #tpu.dimension_semantics<arbitrary>], iteration_bounds = array<i64: 1, 1>, scalar_prefetch = 0 : i64, scratch_operands = 1 : i64, tpu.core_type = #tpu.core_type<tc>, window_params = [{transform_indices = @transform_0, window_bounds = array<i64: 16, 128>}, {transform_indices = @transform_1, window_bounds = array<i64: 128, 128>}, {transform_indices = @transform_2, window_bounds = array<i64: 1, 128>}, {transform_indices = @transform_3, window_bounds = array<i64: 128, 128>}, {pipeline_mode = #tpu.pipeline_mode<synchronous>, transform_indices = @transform_4, window_bounds = array<i64: 1, 128>}, {transform_indices = @transform_5, window_bounds = array<i64: 16, 128>}]} {
    %c0_i32 = arith.constant 0 : i32
    %0 = arith.cmpi eq, %arg1, %c0_i32 : i32
    %1 = arith.extui %0 : i1 to i32
    %c0_i32_0 = arith.constant 0 : i32
    %2 = arith.cmpi ne, %1, %c0_i32_0 : i32
    scf.if %2 {
      %cst_16 = arith.constant 0.000000e+00 : f32
      %20 = vector.broadcast %cst_16 : f32 to vector<16x128xf32>
      %c0_17 = arith.constant 0 : index
      %c0_18 = arith.constant 0 : index
      %21 = vector.load %arg8[%c0_17, %c0_18] : memref<16x128xf32, #tpu.memory_space<vmem>>, vector<16x128xf32>
      tpu.vector_store %arg8[%c0_17, %c0_18], %20 {strides = array<i32>} : memref<16x128xf32, #tpu.memory_space<vmem>>, vector<16x128xf32>,
    } else {
    }
    %c0 = arith.constant 0 : index
    %c0_1 = arith.constant 0 : index
    %3 = vector.load %arg2[%c0, %c0_1] : memref<16x128xbf16, #tpu.memory_space<vmem>>, vector<16x128xbf16>
    %c0_2 = arith.constant 0 : index
    %c0_3 = arith.constant 0 : index
    %4 = vector.load %arg3[%c0_2, %c0_3] : memref<128x128xbf16, #tpu.memory_space<vmem>>, vector<128x128xbf16>
    %cst = arith.constant dense<0.000000e+00> : vector<16x128xf32>
    %5 = tpu.matmul %3, %4, %cst {dimension_numbers = #tpu.dot_dimension_numbers<[1], [0], [0], [1], [0, 0, 1, 1], [], []>} : vector<16x128xbf16>, vector<128x128xbf16>, vector<16x128xf32> -> vector<16x128xf32>
    %c0_4 = arith.constant 0 : index
    %c0_5 = arith.constant 0 : index
    %6 = vector.load %arg4[%c0_4, %c0_5] : memref<1x128xf32, #tpu.memory_space<vmem>>, vector<1x128xf32>
    %7 = vector.broadcast %6 : vector<1x128xf32> to vector<16x128xf32>
    %8 = arith.addf %5, %7 : vector<16x128xf32>
    %cst_6 = arith.constant 0.000000e+00 : f32
    %9 = vector.broadcast %cst_6 : f32 to vector<16x128xf32>
    %10 = arith.maximumf %8, %9 : vector<16x128xf32>
    %c0_7 = arith.constant 0 : index
    %c0_8 = arith.constant 0 : index
    %11 = vector.load %arg8[%c0_7, %c0_8] : memref<16x128xf32, #tpu.memory_space<vmem>>, vector<16x128xf32>
    %12 = arith.truncf %10 : vector<16x128xf32> to vector<16x128xbf16>
    %c0_9 = arith.constant 0 : index
    %c0_10 = arith.constant 0 : index
    %13 = vector.load %arg5[%c0_9, %c0_10] : memref<128x128xbf16, #tpu.memory_space<vmem>>, vector<128x128xbf16>
    %cst_11 = arith.constant dense<0.000000e+00> : vector<16x128xf32>
    %14 = tpu.matmul %12, %13, %cst_11 {dimension_numbers = #tpu.dot_dimension_numbers<[1], [0], [0], [1], [0, 0, 1, 1], [], []>} : vector<16x128xbf16>, vector<128x128xbf16>, vector<16x128xf32> -> vector<16x128xf32>
    %15 = arith.addf %11, %14 : vector<16x128xf32>
    %c0_12 = arith.constant 0 : index
    %c0_13 = arith.constant 0 : index
    %16 = vector.load %arg8[%c0_12, %c0_13] : memref<16x128xf32, #tpu.memory_space<vmem>>, vector<16x128xf32>
    tpu.vector_store %arg8[%c0_12, %c0_13], %15 {strides = array<i32>} : memref<16x128xf32, #tpu.memory_space<vmem>>, vector<16x128xf32>,
    %c0_i32_14 = arith.constant 0 : i32
    %17 = arith.cmpi eq, %arg1, %c0_i32_14 : i32
    %18 = arith.extui %17 : i1 to i32
    %c0_i32_15 = arith.constant 0 : i32
    %19 = arith.cmpi ne, %18, %c0_i32_15 : i32
    scf.if %19 {
      %c0_16 = arith.constant 0 : index
      %c0_17 = arith.constant 0 : index
      %20 = vector.load %arg8[%c0_16, %c0_17] : memref<16x128xf32, #tpu.memory_space<vmem>>, vector<16x128xf32>
      %c0_18 = arith.constant 0 : index
      %c0_19 = arith.constant 0 : index
      %21 = vector.load %arg6[%c0_18, %c0_19] : memref<1x128xf32, #tpu.memory_space<vmem>>, vector<1x128xf32>
      %22 = vector.broadcast %21 : vector<1x128xf32> to vector<16x128xf32>
      %23 = arith.addf %20, %22 : vector<16x128xf32>
      %c0_20 = arith.constant 0 : index
      %c0_21 = arith.constant 0 : index
      %24 = vector.load %arg7[%c0_20, %c0_21] : memref<16x128xf32, #tpu.memory_space<vmem>>, vector<16x128xf32>
      tpu.vector_store %arg7[%c0_20, %c0_21], %23 {strides = array<i32>} : memref<16x128xf32, #tpu.memory_space<vmem>>, vector<16x128xf32>,
    } else {
    }
    return
  }
  func.func @transform_0(%arg0: i32, %arg1: i32) -> (i32, i32) {
    %c0_i32 = arith.constant 0 : i32
    %c0_i32_0 = arith.constant 0 : i32
    return %arg0, %c0_i32 : i32, i32
  }
  func.func @transform_1(%arg0: i32, %arg1: i32) -> (i32, i32) {
    %c0_i32 = arith.constant 0 : i32
    %c0_i32_0 = arith.constant 0 : i32
    return %c0_i32, %arg1 : i32, i32
  }
  func.func @transform_2(%arg0: i32, %arg1: i32) -> (i32, i32) {
    %c0_i32 = arith.constant 0 : i32
    %c0_i32_0 = arith.constant 0 : i32
    return %c0_i32, %arg1 : i32, i32
  }
  func.func @transform_3(%arg0: i32, %arg1: i32) -> (i32, i32) {
    %c0_i32 = arith.constant 0 : i32
    %c0_i32_0 = arith.constant 0 : i32
    return %arg1, %c0_i32 : i32, i32
  }
  func.func @transform_4(%arg0: i32, %arg1: i32) -> (i32, i32) {
    %c0_i32 = arith.constant 0 : i32
    %c0_i32_0 = arith.constant 0 : i32
    %c0_i32_1 = arith.constant 0 : i32
    return %c0_i32, %c0_i32_0 : i32, i32
  }
  func.func @transform_5(%arg0: i32, %arg1: i32) -> (i32, i32) {
    %c0_i32 = arith.constant 0 : i32
    %c0_i32_0 = arith.constant 0 : i32
    return %arg0, %c0_i32 : i32, i32
  }
}

</mosaic_0001>

<llo_original>
// kernel: tpu_custom_call.1
$region0: #{tpu_custom_call.1}
  #allocation0 [shape = 'u32[]', space=smem, size = 0x4, offset = 0x4, fixed_abs, tag = 'smem constant byte address 0x4 - core index']
  #allocation1 [shape = 'u32[72,128]{1,0:T(1,128)}', space=vmem, size = 0x9000, scoped, tag = 'internal scratch']
  #allocation2 [shape = 'f32[16,128]{1,0:T(8,128)}', space=vmem, size = 0x2000, scoped, tag = 'scratch operand']
  %s0 = inlined_call_operand.hbm [shape: bf16[16,128], index: 0, kind: input, shape index: {}]
  %s1 = inlined_call_operand.hbm [shape: bf16[128,128], index: 1, kind: input, shape index: {}]
  %s2 = inlined_call_operand.vmem [shape: f32[1,128], index: 2, kind: input, shape index: {}]
  %s3 = inlined_call_operand.hbm [shape: bf16[128,128], index: 3, kind: input, shape index: {}]
  %s4 = inlined_call_operand.vmem [shape: f32[1,128], index: 4, kind: input, shape index: {}]
  %s5 = inlined_call_operand.hbm [shape: f32[16,128], index: 5, kind: output, shape index: {}]
  %s6 = sld [smem:[#allocation0]]
  $region50: #{tpu_custom_call.1} parent=0
    _
  %s8 = ssub.s32 1, %s6
  %s9 = scalar_select 0, %s8, %s6
  $region1: #{tpu_custom_call.1} parent=0
    #allocation3 [shape = 'u8[4096]{0}', space=vmem, size = 0x1000, scoped, tag = 'input window, operand 0, single buffered']
    #allocation4 [shape = 's32[1]{0}', space=sflag, size = 0x4, scoped, tag = 'scoped memory for tpu_custom_call.1']
    #allocation5 [shape = 's32[1]{0}', space=sflag, size = 0x4, scoped, tag = 'scoped memory for tpu_custom_call.1']
    #allocation6 [shape = 'u8[32768]{0}', space=vmem, size = 0x8000, scoped, tag = 'input window, operand 1, single buffered']
    #allocation7 [shape = 's32[1]{0}', space=sflag, size = 0x4, scoped, tag = 'scoped memory for tpu_custom_call.1']
    #allocation8 [shape = 'u8[32768]{0}', space=vmem, size = 0x8000, scoped, tag = 'input window, operand 3, single buffered']
    #allocation9 [shape = 'u8[8192]{0}', space=vmem, size = 0x2000, scoped, tag = 'output window, operand 0, single buffered']
    %10 = vsyncpa [#allocation4], 0
    %11 = vsyncpa [#allocation7], 0
    %12 = vsyncpa [#allocation5], 0
    // Predicated region
    $region2: #{tpu_custom_call.1} parent=1 // pred_check
      _
    $region3: #{tpu_custom_call.1} parent=1 // pred_check_branch
      %14 = sbr.rel (0) target = $region5
    $region4: #{tpu_custom_call.1} parent=1 // pred_region
      %16 = vsyncadd [#allocation4], 0
      %s17 = sshll.u32 %s0, 4
      %s18 = int_to_ptr.hbm [resolvable:$true] %s17
      %s19 = sshll.u32 [#allocation3], 4
      %s20 = int_to_ptr.vmem [resolvable:$true] %s19
      %25 = dma.hbm_to_vmem [thread:$0]  %s18, 128, %s20, [#allocation4], 64, 64, 4
    $region5: #{tpu_custom_call.1} parent=1 // pred_fallthru
      _
    // Predicated region
    $region6: #{tpu_custom_call.1} parent=1 // pred_check
      _
    $region7: #{tpu_custom_call.1} parent=1 // pred_check_branch
      %27 = sbr.rel (0) target = $region9
    $region8: #{tpu_custom_call.1} parent=1 // pred_region
      %29 = vsyncadd [#allocation7], 0
      %s30 = sshll.u32 %s1, 4
      %s31 = int_to_ptr.hbm [resolvable:$true] %s30
      %s32 = sshll.u32 [#allocation6], 4
      %s33 = int_to_ptr.vmem [resolvable:$true] %s32
      %38 = dma.hbm_to_vmem [thread:$0]  %s31, 1024, %s33, [#allocation7], 64, 64, 4
    $region9: #{tpu_custom_call.1} parent=1 // pred_fallthru
      _
    // Predicated region
    $region10: #{tpu_custom_call.1} parent=1 // pred_check
      _
    $region11: #{tpu_custom_call.1} parent=1 // pred_check_branch
      %40 = sbr.rel (0) target = $region13
    $region12: #{tpu_custom_call.1} parent=1 // pred_region
      _
    $region13: #{tpu_custom_call.1} parent=1 // pred_fallthru
      _
    // Predicated region
    $region14: #{tpu_custom_call.1} parent=1 // pred_check
      _
    $region15: #{tpu_custom_call.1} parent=1 // pred_check_branch
      %42 = sbr.rel (0) target = $region17
    $region16: #{tpu_custom_call.1} parent=1 // pred_region
      %44 = vsyncadd [#allocation7], 0
      %s45 = sshll.u32 %s3, 4
      %s46 = int_to_ptr.hbm [resolvable:$true] %s45
      %s47 = sshll.u32 [#allocation8], 4
      %s48 = int_to_ptr.vmem [resolvable:$true] %s47
      %53 = dma.hbm_to_vmem [thread:$0]  %s46, 1024, %s48, [#allocation7], 64, 64, 4
    $region17: #{tpu_custom_call.1} parent=1 // pred_fallthru
      _
    // Predicated region
    $region18: #{tpu_custom_call.1} parent=1 // pred_check
      _
    $region19: #{tpu_custom_call.1} parent=1 // pred_check_branch
      %55 = sbr.rel (0) target = $region21
    $region20: #{tpu_custom_call.1} parent=1 // pred_region
      _
    $region21: #{tpu_custom_call.1} parent=1 // pred_fallthru
      _
    // Predicated region
    $region22: #{tpu_custom_call.1} parent=1 // pred_check
      _
    $region23: #{tpu_custom_call.1} parent=1 // pred_check_branch
      %57 = sbr.rel (0) target = $region25
    $region24: #{tpu_custom_call.1} parent=1 // pred_region
      %59 = dma.done [#allocation4], 128
    $region25: #{tpu_custom_call.1} parent=1 // pred_fallthru
      _
    // Predicated region
    $region26: #{tpu_custom_call.1} parent=1 // pred_check
      _
    $region27: #{tpu_custom_call.1} parent=1 // pred_check_branch
      %61 = sbr.rel (0) target = $region29
    $region28: #{tpu_custom_call.1} parent=1 // pred_region
      %63 = dma.done [#allocation7], 1024
    $region29: #{tpu_custom_call.1} parent=1 // pred_fallthru
      _
    // Predicated region
    $region30: #{tpu_custom_call.1} parent=1 // pred_check
      _
    $region31: #{tpu_custom_call.1} parent=1 // pred_check_branch
      %65 = sbr.rel (0) target = $region33
    $region32: #{tpu_custom_call.1} parent=1 // pred_region
      %67 = dma.done [#allocation7], 1024
    $region33: #{tpu_custom_call.1} parent=1 // pred_fallthru
      _
    %p68 = scmp.eq.s32.totalorder 0, 0
    // Predicated region
    $region34: #{tpu_custom_call.1} parent=1 // pred_check
      %p69 = pneg %p68
    $region35: #{tpu_custom_call.1} parent=1 // pred_check_branch
      %71 = sbr.rel (%p69) target = $region37
    $region36: #{tpu_custom_call.1} parent=1 // pred_region
      %72 = vst [vmem:[#allocation2] sm:$0xff] 0.0
      %73 = vst [vmem:[#allocation2 + $0x8] sm:$0xff] 0.0
    $region37: #{tpu_custom_call.1} parent=1 // pred_fallthru
      _
    %v74 = vld [vmem:[#allocation3] sm:$0xf]
    %v75 = vld [vmem:[#allocation3 + $0x4] sm:$0xf]
    %v76 = vld [vmem:[#allocation6] sm:$0xf]
    %v77 = vld [vmem:[#allocation6 + $0x4] sm:$0xf]
    %v78 = vld [vmem:[#allocation6 + $0x8] sm:$0xf]
    %v79 = vld [vmem:[#allocation6 + $0xc] sm:$0xf]
    %v80 = vld [vmem:[#allocation6 + $0x10] sm:$0xf]
    %v81 = vld [vmem:[#allocation6 + $0x14] sm:$0xf]
    %v82 = vld [vmem:[#allocation6 + $0x18] sm:$0xf]
    %v83 = vld [vmem:[#allocation6 + $0x1c] sm:$0xf]
    %v84 = vld [vmem:[#allocation6 + $0x20] sm:$0xf]
    %v85 = vld [vmem:[#allocation6 + $0x24] sm:$0xf]
    %v86 = vld [vmem:[#allocation6 + $0x28] sm:$0xf]
    %v87 = vld [vmem:[#allocation6 + $0x2c] sm:$0xf]
    %v88 = vld [vmem:[#allocation6 + $0x30] sm:$0xf]
    %v89 = vld [vmem:[#allocation6 + $0x34] sm:$0xf]
    %v90 = vld [vmem:[#allocation6 + $0x38] sm:$0xf]
    %v91 = vld [vmem:[#allocation6 + $0x3c] sm:$0xf]
    %v92 = vld [vmem:[%s2] sm:$0x1]
    %v94 = vperm.slane %v92, 0
    %v98 = vunpack.c.l.b16 %v74
    %v99 = vunpack.c.l.b16 %v75
    %v100 = vpack.c.b16 %v99, %v98
    %v118 = vunpack.c.l.b16 %v76
    %v119 = vunpack.c.l.b16 %v77
    %v120 = vunpack.c.l.b16 %v78
    %v121 = vunpack.c.l.b16 %v79
    %v122 = vunpack.c.l.b16 %v80
    %v123 = vunpack.c.l.b16 %v81
    %v124 = vunpack.c.l.b16 %v82
    %v125 = vunpack.c.l.b16 %v83
    %v126 = vunpack.c.l.b16 %v84
    %v127 = vunpack.c.l.b16 %v85
    %v128 = vunpack.c.l.b16 %v86
    %v129 = vunpack.c.l.b16 %v87
    %v130 = vunpack.c.l.b16 %v88
    %v131 = vunpack.c.l.b16 %v89
    %v132 = vunpack.c.l.b16 %v90
    %v133 = vunpack.c.l.b16 %v91
    %v134 = vpack.c.b16 %v119, %v118
    %v135 = vpack.c.b16 %v121, %v120
    %v136 = vpack.c.b16 %v123, %v122
    %v137 = vpack.c.b16 %v125, %v124
    %v138 = vpack.c.b16 %v127, %v126
    %v139 = vpack.c.b16 %v129, %v128
    %v140 = vpack.c.b16 %v131, %v130
    %v141 = vpack.c.b16 %v133, %v132
    %150 = vmatpush.bf16.msra.mxu0 %v141
    %151 = vmatpush.bf16.msra.mxu0 %v140
    %152 = vmatpush.bf16.msra.mxu0 %v139
    %153 = vmatpush.bf16.msra.mxu0 %v138
    %154 = vmatpush.bf16.msra.mxu0 %v137
    %155 = vmatpush.bf16.msra.mxu0 %v136
    %156 = vmatpush.bf16.msra.mxu0 %v135
    %157 = vmatpush.bf16.msra.mxu0 %v134
    %158 = vmatmul.bf16.gmra.mxu0 %v100
    %v159 = vpop.f32.mrf.mxu0
    %v160 = vadd.f32 %v94, %v159
    %v161 = vpop.f32.mrf.mxu0
    %v162 = vadd.f32 %v94, %v161
    %163 = vdwg.mxu0
    %v164 = vmax.f32 %v160, 0.0
    %v165 = vmax.f32 %v162, 0.0
    %v166 = vld [vmem:[#allocation2] sm:$0xff]
    %v167 = vld [vmem:[#allocation2 + $0x8] sm:$0xff]
    %v168 = vpack.c.bf16 %v165, %v164
    %v169 = vld [vmem:[#allocation8] sm:$0xf]
    %v170 = vld [vmem:[#allocation8 + $0x4] sm:$0xf]
    %v171 = vld [vmem:[#allocation8 + $0x8] sm:$0xf]
    %v172 = vld [vmem:[#allocation8 + $0xc] sm:$0xf]
    %v173 = vld [vmem:[#allocation8 + $0x10] sm:$0xf]
    %v174 = vld [vmem:[#allocation8 + $0x14] sm:$0xf]
    %v175 = vld [vmem:[#allocation8 + $0x18] sm:$0xf]
    %v176 = vld [vmem:[#allocation8 + $0x1c] sm:$0xf]
    %v177 = vld [vmem:[#allocation8 + $0x20] sm:$0xf]
    %v178 = vld [vmem:[#allocation8 + $0x24] sm:$0xf]
    %v179 = vld [vmem:[#allocation8 + $0x28] sm:$0xf]
    %v180 = vld [vmem:[#allocation8 + $0x2c] sm:$0xf]
    %v181 = vld [vmem:[#allocation8 + $0x30] sm:$0xf]
    %v182 = vld [vmem:[#allocation8 + $0x34] sm:$0xf]
    %v183 = vld [vmem:[#allocation8 + $0x38] sm:$0xf]
    %v184 = vld [vmem:[#allocation8 + $0x3c] sm:$0xf]
    %v201 = vunpack.c.l.b16 %v169
    %v202 = vunpack.c.l.b16 %v170
    %v203 = vunpack.c.l.b16 %v171
    %v204 = vunpack.c.l.b16 %v172
    %v205 = vunpack.c.l.b16 %v173
    %v206 = vunpack.c.l.b16 %v174
    %v207 = vunpack.c.l.b16 %v175
    %v208 = vunpack.c.l.b16 %v176
    %v209 = vunpack.c.l.b16 %v177
    %v210 = vunpack.c.l.b16 %v178
    %v211 = vunpack.c.l.b16 %v179
    %v212 = vunpack.c.l.b16 %v180
    %v213 = vunpack.c.l.b16 %v181
    %v214 = vunpack.c.l.b16 %v182
    %v215 = vunpack.c.l.b16 %v183
    %v216 = vunpack.c.l.b16 %v184
    %v217 = vpack.c.b16 %v202, %v201
    %v218 = vpack.c.b16 %v204, %v203
    %v219 = vpack.c.b16 %v206, %v205
    %v220 = vpack.c.b16 %v208, %v207
    %v221 = vpack.c.b16 %v210, %v209
    %v222 = vpack.c.b16 %v212, %v211
    %v223 = vpack.c.b16 %v214, %v213
    %v224 = vpack.c.b16 %v216, %v215
    %233 = vmatpush.bf16.msra.mxu0 %v224
    %234 = vmatpush.bf16.msra.mxu0 %v223
    %235 = vmatpush.bf16.msra.mxu0 %v222
    %236 = vmatpush.bf16.msra.mxu0 %v221
    %237 = vmatpush.bf16.msra.mxu0 %v220
    %238 = vmatpush.bf16.msra.mxu0 %v219
    %239 = vmatpush.bf16.msra.mxu0 %v218
    %240 = vmatpush.bf16.msra.mxu0 %v217
    %241 = vmatmul.bf16.gmra.mxu0 %v168
    %v242 = vpop.f32.mrf.mxu0
    %v243 = vadd.f32 0.0, %v242
    %v244 = vpop.f32.mrf.mxu0
    %v245 = vadd.f32 0.0, %v244
    %246 = vdwg.mxu0
    %v247 = vadd.f32 %v166, %v243
    %v248 = vadd.f32 %v167, %v245
    %249 = vst [vmem:[#allocation2] sm:$0xff] %v247
    %250 = vst [vmem:[#allocation2 + $0x8] sm:$0xff] %v248
    // Predicated region
    $region38: #{tpu_custom_call.1} parent=1 // pred_check
      %p251 = pneg %p68
    $region39: #{tpu_custom_call.1} parent=1 // pred_check_branch
      %253 = sbr.rel (%p251) target = $region41
    $region40: #{tpu_custom_call.1} parent=1 // pred_region
      %v254 = vld [vmem:[#allocation2] sm:$0xff]
      %v255 = vld [vmem:[#allocation2 + $0x8] sm:$0xff]
      %v256 = vld [vmem:[%s4] sm:$0x1]
      %v258 = vperm.slane %v256, 0
      %v260 = vadd.f32 %v254, %v258
      %v261 = vadd.f32 %v255, %v258
      %262 = vst [vmem:[#allocation9] sm:$0xff] %v260
      %263 = vst [vmem:[#allocation9 + $0x8] sm:$0xff] %v261
    $region41: #{tpu_custom_call.1} parent=1 // pred_fallthru
      _
    // Predicated region
    $region42: #{tpu_custom_call.1} parent=1 // pred_check
      _
    $region43: #{tpu_custom_call.1} parent=1 // pred_check_branch
      %265 = sbr.rel (0) target = $region45
    $region44: #{tpu_custom_call.1} parent=1 // pred_region
      %267 = vsyncadd [#allocation5], 0
      %s268 = sshll.u32 [#allocation9], 4
      %s269 = int_to_ptr.vmem [resolvable:$true] %s268
      %s270 = sshll.u32 %s5, 4
      %s271 = int_to_ptr.hbm [resolvable:$true] %s270
      %276 = dma.vmem_to_hbm [thread:$0]  %s269, 256, %s271, [#allocation5], 128, 128, 8
    $region45: #{tpu_custom_call.1} parent=1 // pred_fallthru
      _
    // Predicated region
    $region46: #{tpu_custom_call.1} parent=1 // pred_check
      _
    $region47: #{tpu_custom_call.1} parent=1 // pred_check_branch
      %278 = sbr.rel (0) target = $region49
    $region48: #{tpu_custom_call.1} parent=1 // pred_region
      %280 = dma.done [#allocation5], 256
    $region49: #{tpu_custom_call.1} parent=1 // pred_fallthru
      _
    %281 = vsyncpa [#allocation4], 1
    %282 = vsyncpa [#allocation7], 1
    %283 = vsyncpa [#allocation5], 1

</llo_original>
